<compile_context>
chip_gen: v6e
topology: v6e:2x2x1
jax: 0.10.0
libtpu: 0.0.40
codegen_flags: <defaults>
</compile_context>

<pallas_src>
import jax
import jax.numpy as jnp
from jax.experimental import pallas as pl
from jax.experimental.pallas import tpu as pltpu

BN_EPS = 1e-5
FEAT = 32        # hidden width of the MLP
CHUNK = 8        # feature chunk (one sublane group) to bound vreg pressure
DEFAULT_TILE_N = 2048  # nodes per grid step (multiple of 128)

_HI = jax.lax.Precision.HIGHEST


def _round_up(v, m):
    return ((v + m - 1) // m) * m


def _linear_mlp_kernel(xt_ref, p_ref, s_ref, out_ref):
    """One row-tile of the fused (folded) MLP.

    xt_ref : [2, TILE_N]  node features, feature-major (nodes on lanes)
    p_ref  : [32, 4]      columns = (w1f[0], w1f[1], b1f, w23)  (BN folded in)
    s_ref  : [2]  SMEM    (prelu_a, b23)
    out_ref: [1, TILE_N]  node scores (lane-dense)
    """
    tile = xt_ref.shape[1]
    a = s_ref[0]       # PReLU slope
    b_out = s_ref[1]   # folded Linear2@Linear3 bias

    # Hoisted sublane broadcasts of the two input features.
    x0 = jnp.broadcast_to(xt_ref[0:1, :], (CHUNK, tile))
    x1 = jnp.broadcast_to(xt_ref[1:2, :], (CHUNK, tile))

    acc = jnp.zeros((CHUNK, tile), jnp.float32)
    # 4 unrolled 8-feature chunks: keeps live intermediates at ~[8, TILE_N].
    for c in range(FEAT // CHUNK):
        r0 = c * CHUNK
        wa = p_ref[r0:r0 + CHUNK, 0:1]   # [8,1] folded Linear1 weight (x0)
        wb = p_ref[r0:r0 + CHUNK, 1:2]   # [8,1] folded Linear1 weight (x1)
        bb = p_ref[r0:r0 + CHUNK, 2:3]   # [8,1] folded Linear1+BN bias
        wo = p_ref[r0:r0 + CHUNK, 3:4]   # [8,1] folded Linear2@Linear3 weight

        h = wa * x0 + wb * x1 + bb               # Linear(2,32) + BatchNorm1d
        act = jnp.where(h >= 0.0, h, a * h)      # PReLU (Dropout p=0 = identity)
        acc = acc + wo * act                     # partial Linear(32,32)@Linear(32,1)

    out_ref[...] = jnp.sum(acc, axis=0, keepdims=True) + b_out


def linear_forward(x, params, tile_n=DEFAULT_TILE_N):
    """x: [N, 2] float32 node features. Returns node scores [N]."""
    n = x.shape[0]
    w1, b1, gamma, beta, prelu_a, w2, b2, w3, b3 = params

    # ---- Fold BatchNorm1d (train-mode batch statistics) into Linear1.
    # mean/var of h1 = x@W1+b1 derive exactly from mean(x) and Cov(x).
    mu = jnp.mean(x, axis=0)                                     # [2]
    xc = x - mu
    cov = jnp.dot(xc.T, xc, precision=_HI) / n                   # [2,2] biased
    mean_h = jnp.dot(mu, w1, precision=_HI) + b1.reshape(-1)     # [32]
    var_h = jnp.einsum('pj,pq,qj->j', w1, cov, w1, precision=_HI)
    scale = gamma.reshape(-1) * jax.lax.rsqrt(var_h + BN_EPS)    # [32]
    w1f = w1 * scale[None, :]                                    # [2,32]
    b1f = (b1.reshape(-1) - mean_h) * scale + beta.reshape(-1)   # [32]

    # ---- Fold Linear(32,32) @ Linear(32,1) (no nonlinearity in between).
    w23 = jnp.dot(w2, w3, precision=_HI).reshape(-1)             # [32]
    b23 = (jnp.dot(b2, w3, precision=_HI) + b3).reshape(())      # scalar

    # ---- Pack per-feature params into one resident VMEM block, scalars to SMEM.
    pblk = jnp.stack([w1f[0], w1f[1], b1f, w23], axis=1)         # [32,4]
    sblk = jnp.stack([prelu_a.reshape(()), b23]).astype(jnp.float32)  # [2]

    # ---- Feature-major, lane-dense node stream, tiled & pipelined over N.
    tile_n = max(128, (tile_n // 128) * 128)
    tile = min(tile_n, _round_up(n, 128))
    n_pad = _round_up(n, tile)
    xt = jnp.pad(x.T.astype(jnp.float32), ((0, 0), (0, n_pad - n)))   # [2, n_pad]

    out = pl.pallas_call(
        _linear_mlp_kernel,
        out_shape=jax.ShapeDtypeStruct((1, n_pad), jnp.float32),
        grid=(n_pad // tile,),
        in_specs=[
            pl.BlockSpec((2, tile), lambda i: (0, i)),                 # x stream
            pl.BlockSpec((FEAT, 4), lambda i: (0, 0)),                 # resident params
            pl.BlockSpec(memory_space=pltpu.MemorySpace.SMEM),         # scalars
        ],
        out_specs=pl.BlockSpec((1, tile), lambda i: (0, i)),           # lane-dense scores
        compiler_params=pltpu.CompilerParams(
            dimension_semantics=("parallel",)),
    )(xt, pblk, sblk)

    # .squeeze() on [N,1] -> [N]; drop padding rows.
    return out.reshape(n_pad)[:n]


def _reference_forward(x, params):
    """Pure-JAX mirror of the original PyTorch module (fp32, HIGHEST precision)."""
    w1, b1, gamma, beta, prelu_a, w2, b2, w3, b3 = params
    h1 = jnp.dot(x, w1, precision=_HI) + b1
    mean = jnp.mean(h1, axis=0, keepdims=True)
    var = jnp.mean((h1 - mean) ** 2, axis=0, keepdims=True)
    h1n = (h1 - mean) * jax.lax.rsqrt(var + BN_EPS) * gamma + beta
    a = prelu_a[0, 0]
    act = jnp.where(h1n >= 0.0, h1n, a * h1n)
    h2 = jnp.dot(act, w2, precision=_HI) + b2
    out = jnp.dot(h2, w3, precision=_HI) + b3
    return out.reshape(-1)


def init_params(key):
    """Deterministic synthetic init mimicking PyTorch default Linear init shapes."""
    k = jax.random.split(key, 6)

    def lin(kw, kb, fan_in, fan_out):
        bound = 1.0 / jnp.sqrt(jnp.float32(fan_in))
        # store weight transposed -> [fan_in, fan_out] so math is x @ W
        w = jax.random.uniform(kw, (fan_in, fan_out), jnp.float32, -bound, bound)
        b = jax.random.uniform(kb, (1, fan_out), jnp.float32, -bound, bound)
        return w, b

    w1, b1 = lin(k[0], k[1], 2, 32)     # nn.Linear(2, 32)
    w2, b2 = lin(k[2], k[3], 32, 32)    # nn.Linear(32, 32)
    w3, b3 = lin(k[4], k[5], 32, 1)     # node_projection nn.Linear(32, 1)

    gamma = jnp.ones((1, 32), jnp.float32)         # BatchNorm1d weight
    beta = jnp.zeros((1, 32), jnp.float32)         # BatchNorm1d bias
    prelu_a = jnp.full((1, 1), 0.25, jnp.float32)  # PReLU default slope

    # TODO(synk): BatchNorm1d running_mean/running_var buffer updates (a torch
    # train-mode side effect) are not modeled; forward output is unaffected.
    return (w1, b1, gamma, beta, prelu_a, w2, b2, w3, b3)


if __name__ == "__main__":
    key = jax.random.PRNGKey(0)
    kx, kp = jax.random.split(key)

    # batch_graph_body.x : [N_nodes, 2]   (batch_graph_face is unused by forward)
    N = 8
    x = jax.random.normal(kx, (N, 2), jnp.float32)

    params = init_params(kp)
    scores = linear_forward(x, params)
    jax.block_until_ready(scores)
    assert scores.shape == (N,)

    ref = _reference_forward(x, params)
    assert jnp.allclose(scores, ref, atol=1e-4, rtol=1e-4), (scores, ref)
    print("KERNEL_OK")
</pallas_src>

<mosaic_0001>
module attributes {stable_mosaic.version = 11 : i64} {
  func.func @_linear_mlp_kernel(%arg0: i32, %arg1: memref<2x128xf32, #tpu.memory_space<vmem>>, %arg2: memref<32x4xf32, #tpu.memory_space<vmem>>, %arg3: memref<2xf32, #tpu.memory_space<smem>>, %arg4: memref<1x128xf32, #tpu.memory_space<vmem>>) attributes {dimension_semantics = [#tpu.dimension_semantics<parallel>], iteration_bounds = array<i64: 1>, scalar_prefetch = 0 : i64, scratch_operands = 0 : i64, tpu.core_type = #tpu.core_type<tc>, window_params = [{transform_indices = @transform_0, window_bounds = array<i64: 2, 128>}, {pipeline_mode = #tpu.pipeline_mode<synchronous>, transform_indices = @transform_1, window_bounds = array<i64: 32, 4>}, {transform_indices = @transform_2, window_bounds = array<i64: 2>}, {transform_indices = @transform_3, window_bounds = array<i64: 1, 128>}]} {
    %c0 = arith.constant 0 : index
    %0 = memref.load %arg3[%c0] : memref<2xf32, #tpu.memory_space<smem>>
    %c1 = arith.constant 1 : index
    %1 = memref.load %arg3[%c1] : memref<2xf32, #tpu.memory_space<smem>>
    %c0_0 = arith.constant 0 : index
    %c0_1 = arith.constant 0 : index
    %2 = vector.load %arg1[%c0_0, %c0_1] : memref<2x128xf32, #tpu.memory_space<vmem>>, vector<1x128xf32>
    %3 = vector.shape_cast %2 : vector<1x128xf32> to vector<1x128xf32>
    %4 = vector.broadcast %3 : vector<1x128xf32> to vector<8x128xf32>
    %c1_2 = arith.constant 1 : index
    %c0_3 = arith.constant 0 : index
    %5 = vector.load %arg1[%c1_2, %c0_3] : memref<2x128xf32, #tpu.memory_space<vmem>>, vector<1x128xf32>
    %6 = vector.shape_cast %5 : vector<1x128xf32> to vector<1x128xf32>
    %7 = vector.broadcast %6 : vector<1x128xf32> to vector<8x128xf32>
    %cst = arith.constant 0.000000e+00 : f32
    %8 = vector.broadcast %cst : f32 to vector<8x128xf32>
    %c0_4 = arith.constant 0 : index
    %c0_5 = arith.constant 0 : index
    %9 = vector.load %arg2[%c0_4, %c0_5] : memref<32x4xf32, #tpu.memory_space<vmem>>, vector<8x1xf32>
    %c0_6 = arith.constant 0 : index
    %c1_7 = arith.constant 1 : index
    %10 = vector.load %arg2[%c0_6, %c1_7] : memref<32x4xf32, #tpu.memory_space<vmem>>, vector<8x1xf32>
    %c0_8 = arith.constant 0 : index
    %c2 = arith.constant 2 : index
    %11 = vector.load %arg2[%c0_8, %c2] : memref<32x4xf32, #tpu.memory_space<vmem>>, vector<8x1xf32>
    %c0_9 = arith.constant 0 : index
    %c3 = arith.constant 3 : index
    %12 = vector.load %arg2[%c0_9, %c3] : memref<32x4xf32, #tpu.memory_space<vmem>>, vector<8x1xf32>
    %13 = vector.broadcast %9 : vector<8x1xf32> to vector<8x128xf32>
    %14 = arith.mulf %13, %4 : vector<8x128xf32>
    %15 = vector.broadcast %10 : vector<8x1xf32> to vector<8x128xf32>
    %16 = arith.mulf %15, %7 : vector<8x128xf32>
    %17 = arith.addf %14, %16 : vector<8x128xf32>
    %18 = vector.broadcast %11 : vector<8x1xf32> to vector<8x128xf32>
    %19 = arith.addf %17, %18 : vector<8x128xf32>
    %cst_10 = arith.constant 0.000000e+00 : f32
    %20 = vector.broadcast %cst_10 : f32 to vector<8x128xf32>
    %21 = arith.cmpf oge, %19, %20 : vector<8x128xf32>
    %22 = vector.broadcast %0 : f32 to vector<8x128xf32>
    %23 = arith.mulf %22, %19 : vector<8x128xf32>
    %24 = arith.select %21, %19, %23 : vector<8x128xi1>, vector<8x128xf32>
    %25 = vector.broadcast %12 : vector<8x1xf32> to vector<8x128xf32>
    %26 = arith.mulf %25, %24 : vector<8x128xf32>
    %27 = arith.addf %8, %26 : vector<8x128xf32>
    %c8 = arith.constant 8 : index
    %c0_11 = arith.constant 0 : index
    %28 = vector.load %arg2[%c8, %c0_11] : memref<32x4xf32, #tpu.memory_space<vmem>>, vector<8x1xf32>
    %c8_12 = arith.constant 8 : index
    %c1_13 = arith.constant 1 : index
    %29 = vector.load %arg2[%c8_12, %c1_13] : memref<32x4xf32, #tpu.memory_space<vmem>>, vector<8x1xf32>
    %c8_14 = arith.constant 8 : index
    %c2_15 = arith.constant 2 : index
    %30 = vector.load %arg2[%c8_14, %c2_15] : memref<32x4xf32, #tpu.memory_space<vmem>>, vector<8x1xf32>
    %c8_16 = arith.constant 8 : index
    %c3_17 = arith.constant 3 : index
    %31 = vector.load %arg2[%c8_16, %c3_17] : memref<32x4xf32, #tpu.memory_space<vmem>>, vector<8x1xf32>
    %32 = vector.broadcast %28 : vector<8x1xf32> to vector<8x128xf32>
    %33 = arith.mulf %32, %4 : vector<8x128xf32>
    %34 = vector.broadcast %29 : vector<8x1xf32> to vector<8x128xf32>
    %35 = arith.mulf %34, %7 : vector<8x128xf32>
    %36 = arith.addf %33, %35 : vector<8x128xf32>
    %37 = vector.broadcast %30 : vector<8x1xf32> to vector<8x128xf32>
    %38 = arith.addf %36, %37 : vector<8x128xf32>
    %cst_18 = arith.constant 0.000000e+00 : f32
    %39 = vector.broadcast %cst_18 : f32 to vector<8x128xf32>
    %40 = arith.cmpf oge, %38, %39 : vector<8x128xf32>
    %41 = vector.broadcast %0 : f32 to vector<8x128xf32>
    %42 = arith.mulf %41, %38 : vector<8x128xf32>
    %43 = arith.select %40, %38, %42 : vector<8x128xi1>, vector<8x128xf32>
    %44 = vector.broadcast %31 : vector<8x1xf32> to vector<8x128xf32>
    %45 = arith.mulf %44, %43 : vector<8x128xf32>
    %46 = arith.addf %27, %45 : vector<8x128xf32>
    %c16 = arith.constant 16 : index
    %c0_19 = arith.constant 0 : index
    %47 = vector.load %arg2[%c16, %c0_19] : memref<32x4xf32, #tpu.memory_space<vmem>>, vector<8x1xf32>
    %c16_20 = arith.constant 16 : index
    %c1_21 = arith.constant 1 : index
    %48 = vector.load %arg2[%c16_20, %c1_21] : memref<32x4xf32, #tpu.memory_space<vmem>>, vector<8x1xf32>
    %c16_22 = arith.constant 16 : index
    %c2_23 = arith.constant 2 : index
    %49 = vector.load %arg2[%c16_22, %c2_23] : memref<32x4xf32, #tpu.memory_space<vmem>>, vector<8x1xf32>
    %c16_24 = arith.constant 16 : index
    %c3_25 = arith.constant 3 : index
    %50 = vector.load %arg2[%c16_24, %c3_25] : memref<32x4xf32, #tpu.memory_space<vmem>>, vector<8x1xf32>
    %51 = vector.broadcast %47 : vector<8x1xf32> to vector<8x128xf32>
    %52 = arith.mulf %51, %4 : vector<8x128xf32>
    %53 = vector.broadcast %48 : vector<8x1xf32> to vector<8x128xf32>
    %54 = arith.mulf %53, %7 : vector<8x128xf32>
    %55 = arith.addf %52, %54 : vector<8x128xf32>
    %56 = vector.broadcast %49 : vector<8x1xf32> to vector<8x128xf32>
    %57 = arith.addf %55, %56 : vector<8x128xf32>
    %cst_26 = arith.constant 0.000000e+00 : f32
    %58 = vector.broadcast %cst_26 : f32 to vector<8x128xf32>
    %59 = arith.cmpf oge, %57, %58 : vector<8x128xf32>
    %60 = vector.broadcast %0 : f32 to vector<8x128xf32>
    %61 = arith.mulf %60, %57 : vector<8x128xf32>
    %62 = arith.select %59, %57, %61 : vector<8x128xi1>, vector<8x128xf32>
    %63 = vector.broadcast %50 : vector<8x1xf32> to vector<8x128xf32>
    %64 = arith.mulf %63, %62 : vector<8x128xf32>
    %65 = arith.addf %46, %64 : vector<8x128xf32>
    %c24 = arith.constant 24 : index
    %c0_27 = arith.constant 0 : index
    %66 = vector.load %arg2[%c24, %c0_27] : memref<32x4xf32, #tpu.memory_space<vmem>>, vector<8x1xf32>
    %c24_28 = arith.constant 24 : index
    %c1_29 = arith.constant 1 : index
    %67 = vector.load %arg2[%c24_28, %c1_29] : memref<32x4xf32, #tpu.memory_space<vmem>>, vector<8x1xf32>
    %c24_30 = arith.constant 24 : index
    %c2_31 = arith.constant 2 : index
    %68 = vector.load %arg2[%c24_30, %c2_31] : memref<32x4xf32, #tpu.memory_space<vmem>>, vector<8x1xf32>
    %c24_32 = arith.constant 24 : index
    %c3_33 = arith.constant 3 : index
    %69 = vector.load %arg2[%c24_32, %c3_33] : memref<32x4xf32, #tpu.memory_space<vmem>>, vector<8x1xf32>
    %70 = vector.broadcast %66 : vector<8x1xf32> to vector<8x128xf32>
    %71 = arith.mulf %70, %4 : vector<8x128xf32>
    %72 = vector.broadcast %67 : vector<8x1xf32> to vector<8x128xf32>
    %73 = arith.mulf %72, %7 : vector<8x128xf32>
    %74 = arith.addf %71, %73 : vector<8x128xf32>
    %75 = vector.broadcast %68 : vector<8x1xf32> to vector<8x128xf32>
    %76 = arith.addf %74, %75 : vector<8x128xf32>
    %cst_34 = arith.constant 0.000000e+00 : f32
    %77 = vector.broadcast %cst_34 : f32 to vector<8x128xf32>
    %78 = arith.cmpf oge, %76, %77 : vector<8x128xf32>
    %79 = vector.broadcast %0 : f32 to vector<8x128xf32>
    %80 = arith.mulf %79, %76 : vector<8x128xf32>
    %81 = arith.select %78, %76, %80 : vector<8x128xi1>, vector<8x128xf32>
    %82 = vector.broadcast %69 : vector<8x1xf32> to vector<8x128xf32>
    %83 = arith.mulf %82, %81 : vector<8x128xf32>
    %84 = arith.addf %65, %83 : vector<8x128xf32>
    %cst_35 = arith.constant dense<0.000000e+00> : vector<128xf32>
    %85 = vector.multi_reduction <add>, %84, %cst_35 [0] : vector<8x128xf32> to vector<128xf32>
    %86 = vector.shape_cast %85 : vector<128xf32> to vector<1x128xf32>
    %87 = vector.broadcast %1 : f32 to vector<1x128xf32>
    %88 = arith.addf %86, %87 : vector<1x128xf32>
    %c0_36 = arith.constant 0 : index
    %c0_37 = arith.constant 0 : index
    %89 = vector.load %arg4[%c0_36, %c0_37] : memref<1x128xf32, #tpu.memory_space<vmem>>, vector<1x128xf32>
    tpu.vector_store %arg4[%c0_36, %c0_37], %88 {strides = array<i32>} : memref<1x128xf32, #tpu.memory_space<vmem>>, vector<1x128xf32>,
    return
  }
  func.func @transform_0(%arg0: i32) -> (i32, i32) {
    %c0_i32 = arith.constant 0 : i32
    %c0_i32_0 = arith.constant 0 : i32
    return %c0_i32, %arg0 : i32, i32
  }
  func.func @transform_1(%arg0: i32) -> (i32, i32) {
    %c0_i32 = arith.constant 0 : i32
    %c0_i32_0 = arith.constant 0 : i32
    %c0_i32_1 = arith.constant 0 : i32
    return %c0_i32, %c0_i32_0 : i32, i32
  }
  func.func @transform_2(%arg0: i32) -> i32 {
    %c0_i32 = arith.constant 0 : i32
    %c0_i32_0 = arith.constant 0 : i32
    return %c0_i32 : i32
  }
  func.func @transform_3(%arg0: i32) -> (i32, i32) {
    %c0_i32 = arith.constant 0 : i32
    %c0_i32_0 = arith.constant 0 : i32
    return %c0_i32, %arg0 : i32, i32
  }
}

</mosaic_0001>

<llo_original>
// kernel: tpu_custom_call.1
$region0: #{tpu_custom_call.1}
  #allocation0 [shape = 'u32[]', space=smem, size = 0x4, offset = 0x4, fixed_abs, tag = 'smem constant byte address 0x4 - core index']
  #allocation1 [shape = 'u32[144,128]{1,0:T(1,128)}', space=vmem, size = 0x12000, scoped, tag = 'internal scratch']
  %s0 = inlined_call_operand.vmem [shape: f32[2,128], index: 0, kind: input, shape index: {}]
  %s1 = inlined_call_operand.vmem [shape: f32[32,4], index: 1, kind: input, shape index: {}]
  %s2 = inlined_call_operand.vmem [shape: f32[2], index: 2, kind: input, shape index: {}]
  %s3 = inlined_call_operand.hbm [shape: f32[1,128], index: 3, kind: output, shape index: {}]
  %s4 = sld [smem:[#allocation0]]
  $region26: #{tpu_custom_call.1} parent=0
    _
  %s6 = ssub.s32 1, %s4
  %s7 = scalar_select 0, %s6, %s4
  $region1: #{tpu_custom_call.1} parent=0
    #allocation2 [shape = 'u8[512]{0}', space=smem, size = 0x200, scoped, tag = 'input window, operand 2, single buffered']
    #allocation3 [shape = 's32[1]{0}', space=sflag, size = 0x4, scoped, tag = 'scoped memory for tpu_custom_call.1']
    #allocation4 [shape = 's32[1]{0}', space=sflag, size = 0x4, scoped, tag = 'scoped memory for tpu_custom_call.1']
    #allocation5 [shape = 'u8[512]{0}', space=vmem, size = 0x400, scoped, tag = 'output window, operand 0, single buffered']
    %8 = vsyncpa [#allocation4], 0
    %9 = vsyncpa [#allocation3], 0
    // Predicated region
    $region2: #{tpu_custom_call.1} parent=1 // pred_check
      _
    $region3: #{tpu_custom_call.1} parent=1 // pred_check_branch
      %11 = sbr.rel (0) target = $region5
    $region4: #{tpu_custom_call.1} parent=1 // pred_region
      _
    $region5: #{tpu_custom_call.1} parent=1 // pred_fallthru
      _
    // Predicated region
    $region6: #{tpu_custom_call.1} parent=1 // pred_check
      _
    $region7: #{tpu_custom_call.1} parent=1 // pred_check_branch
      %13 = sbr.rel (0) target = $region9
    $region8: #{tpu_custom_call.1} parent=1 // pred_region
      _
    $region9: #{tpu_custom_call.1} parent=1 // pred_fallthru
      _
    // Predicated region
    $region10: #{tpu_custom_call.1} parent=1 // pred_check
      _
    $region11: #{tpu_custom_call.1} parent=1 // pred_check_branch
      %15 = sbr.rel (0) target = $region13
    $region12: #{tpu_custom_call.1} parent=1 // pred_region
      %s17 = ssub.s32 16, 16
      %18 = vsyncadd [#allocation4], %s17
      %s20 = sshll.u32 %s2, 4
      %s21 = int_to_ptr.vmem [resolvable:$true] %s20
      %23 = dma.vmem_to_smem %s21, 16, [#allocation2], [#allocation4]
    $region13: #{tpu_custom_call.1} parent=1 // pred_fallthru
      _
    // Predicated region
    $region14: #{tpu_custom_call.1} parent=1 // pred_check
      _
    $region15: #{tpu_custom_call.1} parent=1 // pred_check_branch
      %25 = sbr.rel (0) target = $region17
    $region16: #{tpu_custom_call.1} parent=1 // pred_region
      %26 = dma.done [#allocation4], 16
    $region17: #{tpu_custom_call.1} parent=1 // pred_fallthru
      _
    %27 = sfence
    %s28 = sld [smem:[#allocation2]]
    %s29 = sld [smem:[#allocation2 + $0x1]]
    %v30 = vld [vmem:[%s0] sm:$0x1]
    %v31 = vlaneseq
    %v32 = vshrl.u32 %v31, 7
    %v33 = vsub.s32 0, %v32
    %v34 = vrot.slane %v30, %v33
    %v35 = vld [vmem:[%s0 + $0x1] sm:$0x1]
    %v36 = vlaneseq
    %v37 = vshrl.u32 %v36, 7
    %v38 = vsub.s32 0, %v37
    %v39 = vrot.slane %v35, %v38
    %v40 = vld [vmem:[%s1] sm:$0xff]
    %42 = vset.pattern.permute.xlu0 0
    %43 = vperm.xlu0 %42, %v40
    %v44 = vpop.permute.xlu0 %43
    %v46 = vmul.f32 %v44, %v34
    %47 = vset.pattern.permute.xlu0 1
    %48 = vperm.xlu0 %47, %v40
    %v49 = vpop.permute.xlu0 %48
    %v51 = vmul.f32 %v49, %v39
    %v52 = vadd.f32 %v46, %v51
    %53 = vset.pattern.permute.xlu0 2
    %54 = vperm.xlu0 %53, %v40
    %v55 = vpop.permute.xlu0 %54
    %v57 = vadd.f32 %v52, %v55
    %vm58 = vcmp.ge.f32.partialorder %v57, 0.0
    %v59 = vstv %s28
    %v60 = vmul.f32 %v59, %v57
    %v61 = vsel %vm58, %v57, %v60
    %62 = vset.pattern.permute.xlu0 3
    %63 = vperm.xlu0 %62, %v40
    %v64 = vpop.permute.xlu0 %63
    %v66 = vmul.f32 %v64, %v61
    %v67 = vadd.f32 %v66, 0.0
    %v68 = vld [vmem:[%s1 + $0x8] sm:$0xff]
    %70 = vset.pattern.permute.xlu0 0
    %71 = vperm.xlu0 %70, %v68
    %v72 = vpop.permute.xlu0 %71
    %v74 = vmul.f32 %v72, %v34
    %75 = vset.pattern.permute.xlu0 1
    %76 = vperm.xlu0 %75, %v68
    %v77 = vpop.permute.xlu0 %76
    %v79 = vmul.f32 %v77, %v39
    %v80 = vadd.f32 %v74, %v79
    %81 = vset.pattern.permute.xlu0 2
    %82 = vperm.xlu0 %81, %v68
    %v83 = vpop.permute.xlu0 %82
    %v85 = vadd.f32 %v80, %v83
    %vm86 = vcmp.ge.f32.partialorder %v85, 0.0
    %v87 = vmul.f32 %v59, %v85
    %v88 = vsel %vm86, %v85, %v87
    %89 = vset.pattern.permute.xlu0 3
    %90 = vperm.xlu0 %89, %v68
    %v91 = vpop.permute.xlu0 %90
    %v93 = vmul.f32 %v91, %v88
    %v94 = vadd.f32 %v67, %v93
    %v95 = vld [vmem:[%s1 + $0x10] sm:$0xff]
    %97 = vset.pattern.permute.xlu0 0
    %98 = vperm.xlu0 %97, %v95
    %v99 = vpop.permute.xlu0 %98
    %v101 = vmul.f32 %v99, %v34
    %102 = vset.pattern.permute.xlu0 1
    %103 = vperm.xlu0 %102, %v95
    %v104 = vpop.permute.xlu0 %103
    %v106 = vmul.f32 %v104, %v39
    %v107 = vadd.f32 %v101, %v106
    %108 = vset.pattern.permute.xlu0 2
    %109 = vperm.xlu0 %108, %v95
    %v110 = vpop.permute.xlu0 %109
    %v112 = vadd.f32 %v107, %v110
    %vm113 = vcmp.ge.f32.partialorder %v112, 0.0
    %v114 = vmul.f32 %v59, %v112
    %v115 = vsel %vm113, %v112, %v114
    %116 = vset.pattern.permute.xlu0 3
    %117 = vperm.xlu0 %116, %v95
    %v118 = vpop.permute.xlu0 %117
    %v120 = vmul.f32 %v118, %v115
    %v121 = vadd.f32 %v94, %v120
    %v122 = vld [vmem:[%s1 + $0x18] sm:$0xff]
    %124 = vset.pattern.permute.xlu0 0
    %125 = vperm.xlu0 %124, %v122
    %v126 = vpop.permute.xlu0 %125
    %v128 = vmul.f32 %v126, %v34
    %129 = vset.pattern.permute.xlu0 1
    %130 = vperm.xlu0 %129, %v122
    %v131 = vpop.permute.xlu0 %130
    %v133 = vmul.f32 %v131, %v39
    %v134 = vadd.f32 %v128, %v133
    %135 = vset.pattern.permute.xlu0 2
    %136 = vperm.xlu0 %135, %v122
    %v137 = vpop.permute.xlu0 %136
    %v139 = vadd.f32 %v134, %v137
    %vm140 = vcmp.ge.f32.partialorder %v139, 0.0
    %v141 = vmul.f32 %v59, %v139
    %v142 = vsel %vm140, %v139, %v141
    %143 = vset.pattern.permute.xlu0 3
    %144 = vperm.xlu0 %143, %v122
    %v145 = vpop.permute.xlu0 %144
    %v147 = vmul.f32 %v145, %v142
    %v148 = vadd.f32 %v121, %v147
    %v149 = vrot.slane %v148, 4
    %v150 = vadd.f32 %v148, %v149
    %v151 = vrot.slane %v150, 2
    %v152 = vadd.f32 %v150, %v151
    %v153 = vrot.slane %v152, 1
    %v154 = vadd.f32 %v152, %v153
    %v155 = vstv %s29
    %v156 = vadd.f32 %v154, %v155
    %157 = vst [vmem:[#allocation5] sm:$0x1] %v156
    // Predicated region
    $region18: #{tpu_custom_call.1} parent=1 // pred_check
      _
    $region19: #{tpu_custom_call.1} parent=1 // pred_check_branch
      %159 = sbr.rel (0) target = $region21
    $region20: #{tpu_custom_call.1} parent=1 // pred_region
      %s161 = ssub.s32 16, 16
      %162 = vsyncadd [#allocation3], %s161
      %s164 = sshll.u32 [#allocation5], 4
      %s165 = int_to_ptr.vmem [resolvable:$true] %s164
      %167 = dma.vmem_to_hbm [thread:$0]  %s165, 16, %s3, [#allocation3]
    $region21: #{tpu_custom_call.1} parent=1 // pred_fallthru
      _
    // Predicated region
    $region22: #{tpu_custom_call.1} parent=1 // pred_check
      _
    $region23: #{tpu_custom_call.1} parent=1 // pred_check_branch
      %169 = sbr.rel (0) target = $region25
    $region24: #{tpu_custom_call.1} parent=1 // pred_region
      %170 = dma.done [#allocation3], 16
    $region25: #{tpu_custom_call.1} parent=1 // pred_fallthru
      _
    %171 = vsyncpa [#allocation3], 1
    %172 = vsyncpa [#allocation4], 1

</llo_original>
